<compile_context>
chip_gen: v7x
topology: tpu7x:2x2x1
jax: 0.10.0
libtpu: 0.0.40
codegen_flags: <defaults>
</compile_context>

<pallas_src>
import functools

import jax
import jax.numpy as jnp
from jax.experimental import pallas as pl
from jax.experimental.pallas import tpu as pltpu


def _salt_and_pepper_kernel(t_pepper, t_noise, bits_ref, x_ref, o_ref):
    # bits_ref: (1, 1, tile) uint32   -- random bits for this spatial tile
    # x_ref / o_ref: (1, C, tile)     -- lane-dense image tile
    bits = bits_ref[...]
    x = x_ref[...]

    noise = bits < jnp.uint32(t_noise)                    # pepper OR salt
    repl = jnp.where(bits < jnp.uint32(t_pepper),         # pepper -> 0, salt -> 1
                     jnp.zeros((), x.dtype),
                     jnp.ones((), x.dtype))

    # Broadcast the (1, 1, tile) plane over channels (sublane broadcast) and
    # apply a single fused select in the native dtype.
    o_ref[...] = jnp.where(jnp.broadcast_to(noise, x.shape),
                           jnp.broadcast_to(repl, x.shape),
                           x)


def _choose_spatial_tile(hw: int, c: int, bytes_per_elem: int,
                         target_block_bytes: int = 2 * 1024 * 1024) -> int:
    """Largest multiple-of-128 tile that divides H*W and keeps the image block
    around `target_block_bytes` (safe for v7x 64MiB VMEM / v5e scoped limit)."""
    if hw % 128 != 0:
        # Fall back to the full plane (block dim == full array dim is legal).
        return hw
    cap = max(128, (target_block_bytes // max(1, c * bytes_per_elem)) // 128 * 128)
    tile = min(hw, cap)
    while hw % tile != 0:
        tile -= 128
    return tile


def salt_and_pepper(image: jax.Array, ratio: float, key: jax.Array) -> jax.Array:
    """Pallas TPU salt-and-pepper augmenter.

    image: (B, C, H, W).  With prob `ratio` a pixel (shared across channels)
    is set to 0.0, with prob `ratio` to 1.0, else left unchanged.
    """
    assert 0.0 <= ratio <= 0.5, "ratio must be in [0, 0.5] (p=[r, r, 1-2r])"
    b, c, h, w = image.shape
    hw = h * w
    bytes_per_elem = jnp.dtype(image.dtype).itemsize
    tile = _choose_spatial_tile(hw, c, bytes_per_elem)

    # One uint32 per pixel, shared across channels (matches (B,1,H,W) mask).
    bits = jax.random.bits(key, (b, 1, hw), dtype=jnp.uint32)

    # Integer thresholds: P(bits < t) == t / 2^32.
    t_pepper = min(int(ratio * 2**32), 2**32 - 1)
    t_noise = min(int(min(2.0 * ratio, 1.0) * 2**32), 2**32 - 1)

    x2 = image.reshape(b, c, hw)  # lane-dense view
    kernel = functools.partial(_salt_and_pepper_kernel, t_pepper, t_noise)

    out = pl.pallas_call(
        kernel,
        out_shape=jax.ShapeDtypeStruct((b, c, hw), image.dtype),
        grid=(b, hw // tile),
        in_specs=[
            pl.BlockSpec((1, 1, tile), lambda i, s: (i, 0, s)),
            pl.BlockSpec((1, c, tile), lambda i, s: (i, 0, s)),
        ],
        out_specs=pl.BlockSpec((1, c, tile), lambda i, s: (i, 0, s)),
        compiler_params=pltpu.CompilerParams(
            dimension_semantics=("parallel", "parallel")),
    )(bits, x2)

    return out.reshape(b, c, h, w)


if __name__ == "__main__":
    B, C, H, W = 2, 4, 16, 16
    ratio = 0.1

    root = jax.random.PRNGKey(0)
    k_img, k_mask = jax.random.split(root)

    # Values strictly inside (0, 1) so any exact 0.0 / 1.0 must come from the mask.
    x = jax.random.uniform(k_img, (B, C, H, W), dtype=jnp.float32,
                           minval=0.2, maxval=0.8)

    y = salt_and_pepper(x, ratio, k_mask)
    y = jax.block_until_ready(y)

    # --- exact reference (same random bits, pure jnp) ---
    bits = jax.random.bits(k_mask, (B, 1, H * W), dtype=jnp.uint32).reshape(B, 1, H, W)
    t_pepper = min(int(ratio * 2**32), 2**32 - 1)
    t_noise = min(int(min(2.0 * ratio, 1.0) * 2**32), 2**32 - 1)
    noise = jnp.broadcast_to(bits < jnp.uint32(t_noise), x.shape)
    repl = jnp.broadcast_to(
        jnp.where(bits < jnp.uint32(t_pepper), 0.0, 1.0).astype(x.dtype), x.shape)
    y_ref = jnp.where(noise, repl, x)

    assert y.shape == x.shape and y.dtype == x.dtype
    assert bool(jnp.all(y == y_ref)), "kernel output mismatch vs reference"

    # structural sanity: mask shared across channels, kept pixels untouched
    zero_mask = (y == 0.0)
    one_mask = (y == 1.0)
    assert bool(jnp.all(zero_mask == zero_mask[:, :1])), "pepper mask not shared over channels"
    assert bool(jnp.all(one_mask == one_mask[:, :1])), "salt mask not shared over channels"
    keep = jnp.logical_not(jnp.logical_or(zero_mask, one_mask))
    assert bool(jnp.all(jnp.where(keep, y == x, True))), "kept pixels were modified"

    print("KERNEL_OK")
</pallas_src>

<mosaic_0001>
module attributes {stable_mosaic.version = 11 : i64} {
  func.func @_salt_and_pepper_kernel(%arg0: i32, %arg1: i32, %arg2: memref<1x1x256xi32, #tpu.memory_space<vmem>>, %arg3: memref<1x4x256xf32, #tpu.memory_space<vmem>>, %arg4: memref<1x4x256xf32, #tpu.memory_space<vmem>>) attributes {dimension_semantics = [#tpu.dimension_semantics<parallel>, #tpu.dimension_semantics<parallel>], iteration_bounds = array<i64: 2, 1>, scalar_prefetch = 0 : i64, scratch_operands = 0 : i64, tpu.core_type = #tpu.core_type<tc>, window_params = [{transform_indices = @transform_0, window_bounds = array<i64: 1, 1, 256>}, {transform_indices = @transform_1, window_bounds = array<i64: 1, 4, 256>}, {transform_indices = @transform_2, window_bounds = array<i64: 1, 4, 256>}]} {
    %c0 = arith.constant 0 : index
    %c0_0 = arith.constant 0 : index
    %c0_1 = arith.constant 0 : index
    %0 = vector.load %arg2[%c0, %c0_0, %c0_1] : memref<1x1x256xi32, #tpu.memory_space<vmem>>, vector<1x1x256xi32>
    %c0_2 = arith.constant 0 : index
    %c0_3 = arith.constant 0 : index
    %c0_4 = arith.constant 0 : index
    %1 = vector.load %arg3[%c0_2, %c0_3, %c0_4] : memref<1x4x256xf32, #tpu.memory_space<vmem>>, vector<1x4x256xf32>
    %c858993459_i32 = arith.constant 858993459 : i32
    %2 = vector.broadcast %c858993459_i32 : i32 to vector<1x1x256xi32>
    %3 = arith.cmpi ult, %0, %2 : vector<1x1x256xi32>
    %c429496729_i32 = arith.constant 429496729 : i32
    %4 = vector.broadcast %c429496729_i32 : i32 to vector<1x1x256xi32>
    %5 = arith.cmpi ult, %0, %4 : vector<1x1x256xi32>
    %cst = arith.constant 0.000000e+00 : f32
    %cst_5 = arith.constant 1.000000e+00 : f32
    %6 = vector.broadcast %cst : f32 to vector<1x1x256xf32>
    %7 = vector.broadcast %cst_5 : f32 to vector<1x1x256xf32>
    %8 = arith.select %5, %6, %7 : vector<1x1x256xi1>, vector<1x1x256xf32>
    %9 = vector.shape_cast %3 : vector<1x1x256xi1> to vector<1x1x256xi1>
    %10 = vector.broadcast %9 : vector<1x1x256xi1> to vector<1x4x256xi1>
    %11 = vector.shape_cast %8 : vector<1x1x256xf32> to vector<1x1x256xf32>
    %12 = vector.broadcast %11 : vector<1x1x256xf32> to vector<1x4x256xf32>
    %13 = arith.select %10, %12, %1 : vector<1x4x256xi1>, vector<1x4x256xf32>
    %c0_6 = arith.constant 0 : index
    %c0_7 = arith.constant 0 : index
    %c0_8 = arith.constant 0 : index
    %14 = vector.load %arg4[%c0_6, %c0_7, %c0_8] : memref<1x4x256xf32, #tpu.memory_space<vmem>>, vector<1x4x256xf32>
    tpu.vector_store %arg4[%c0_6, %c0_7, %c0_8], %13 {strides = array<i32>} : memref<1x4x256xf32, #tpu.memory_space<vmem>>, vector<1x4x256xf32>,
    return
  }
  func.func @transform_0(%arg0: i32, %arg1: i32) -> (i32, i32, i32) {
    %c0_i32 = arith.constant 0 : i32
    %c0_i32_0 = arith.constant 0 : i32
    return %arg0, %c0_i32, %arg1 : i32, i32, i32
  }
  func.func @transform_1(%arg0: i32, %arg1: i32) -> (i32, i32, i32) {
    %c0_i32 = arith.constant 0 : i32
    %c0_i32_0 = arith.constant 0 : i32
    return %arg0, %c0_i32, %arg1 : i32, i32, i32
  }
  func.func @transform_2(%arg0: i32, %arg1: i32) -> (i32, i32, i32) {
    %c0_i32 = arith.constant 0 : i32
    %c0_i32_0 = arith.constant 0 : i32
    return %arg0, %c0_i32, %arg1 : i32, i32, i32
  }
}

</mosaic_0001>

<llo_original>
// kernel: tpu_custom_call.1
$region0: #{tpu_custom_call.1}
  #allocation0 [shape = 'u32[]', space=smem, size = 0x4, offset = 0x4, fixed_abs, tag = 'smem constant byte address 0x4 - core index']
  #allocation1 [shape = 'u32[144,128]{1,0:T(1,128)}', space=vmem, size = 0x12000, scoped, tag = 'internal scratch']
  %s0 = inlined_call_operand.hbm [shape: u32[2,1,256], index: 0, kind: input, shape index: {}]
  %s1 = inlined_call_operand.hbm [shape: f32[2,4,256], index: 1, kind: input, shape index: {}]
  %s2 = inlined_call_operand.hbm [shape: f32[2,4,256], index: 2, kind: output, shape index: {}]
  %s3 = sld [smem:[#allocation0]]
  $region49: #{tpu_custom_call.1} parent=0
    _
  %s5 = ssub.s32 1, %s3
  %s6 = scalar_select 0, %s5, %s3
  $region1: #{tpu_custom_call.1} parent=0
    #allocation2 [shape = 'u8[2048]{0}', space=vmem, size = 0x800, scoped, tag = 'input window, operand 0']
    #allocation3 [shape = 's32[2]{0}', space=sflag, size = 0x8, scoped, tag = 'scoped memory for tpu_custom_call.1']
    #allocation4 [shape = 's32[2]{0}', space=sflag, size = 0x8, scoped, tag = 'scoped memory for tpu_custom_call.1']
    #allocation5 [shape = 'u8[8192]{0}', space=vmem, size = 0x2000, scoped, tag = 'input window, operand 1']
    #allocation6 [shape = 's32[2]{0}', space=sflag, size = 0x8, scoped, tag = 'scoped memory for tpu_custom_call.1']
    #allocation7 [shape = 'u8[8192]{0}', space=vmem, size = 0x2000, scoped, tag = 'output window, operand 0']
    %7 = vsyncpa [#allocation3], 0
    %s8 = scalar_lea.sflag [#allocation3], 1
    %9 = vsyncpa %s8, 0
    %10 = vsyncpa [#allocation6], 0
    %s11 = scalar_lea.sflag [#allocation6], 1
    %12 = vsyncpa %s11, 0
    %13 = vsyncpa [#allocation4], 0
    %s14 = scalar_lea.sflag [#allocation4], 1
    %15 = vsyncpa %s14, 0
    loop: start=0, step=1, limit=4
    $region2: #{tpu_custom_call.1} parent=1 // loop_pre_header
      _
    $region3: #{tpu_custom_call.1} parent=1 // loop_header
      %s17 = sphi 0, %s21
      %p18 = scmp.ge.s32.totalorder %s17, 4
      %s24 = sphi 0, %s36
      %s25 = sphi 0, %s32
      %s26 = sphi 0, %s24
      %s27 = sphi 0, %s25
      %s28 = sphi 0, %s26
      %s29 = sphi 0, %s27
      %s41 = sphi 0, %s43
      %s44 = sphi 0, %s41
      %s45 = sphi 0, %s44
      %s61 = sphi 0, %s45
      %s69 = sphi 0, %s71
      %s72 = sphi 0, %s69
      %s73 = sphi 0, %s72
      %s89 = sphi 0, %s73
      %s97 = sphi 0, %s99
      %s100 = sphi 0, %s97
      %s101 = sphi 0, %s100
      %s117 = sphi 0, %s101
    $region4: #{tpu_custom_call.1} parent=1 // loop_header_branch
      %20 = sbr.rel (%p18) target = $region8
    $region5: #{tpu_custom_call.1} parent=1 // loop_body
      %s22 = ssub.s32 %s17, 1
      %s23 = ssub.s32 %s17, 2
      %s30 = sadd.s32 1, %s25
      %p31 = scmp.ge.s32.totalorder %s30, 1
      %s32 = scalar_select %p31, 0, %s30
      %s33 = sadd.s32 1, %s24
      %s34 = scalar_select %p31, %s33, %s24
      %p35 = scmp.ge.s32.totalorder %s34, 2
      %s36 = scalar_select %p35, 0, %s34
      %s37 = ssub.s32 %s24, %s36
      %s38 = ssub.s32 %s25, %s32
      %s39 = sor.u32 %s37, %s38
      %p40 = scmp.eq.s32.totalorder %s39, 0
      %s42 = sadd.s32 %s41, 1
      %s43 = scalar_select %p40, %s41, %s42
      %p46 = pneg %p40
      %p47 = scmp.eq.s32.totalorder %s17, 1
      %p48 = por %p46, %p47
      %p49 = scmp.ne.s32.totalorder %s41, %s44
      %p50 = scmp.eq.s32.totalorder %s17, 0
      %p51 = por %p49, %p50
      %p52 = scmp.ne.s32.totalorder %s41, %s44
      %p53 = scmp.eq.s32.totalorder %s22, 1
      %p54 = por %p52, %p53
      %p55 = scmp.ne.s32.totalorder %s44, %s45
      %p56 = scmp.eq.s32.totalorder %s22, 0
      %p57 = por %p55, %p56
      %p58 = scmp.ne.s32.totalorder %s44, %s45
      %p59 = scmp.eq.s32.totalorder %s23, 1
      %p60 = por %p58, %p59
      %p62 = scmp.ne.s32.totalorder %s45, %s61
      %p63 = scmp.eq.s32.totalorder %s23, 0
      %p64 = por %p62, %p63
      %s65 = ssub.s32 %s24, %s36
      %s66 = ssub.s32 %s25, %s32
      %s67 = sor.u32 %s65, %s66
      %p68 = scmp.eq.s32.totalorder %s67, 0
      %s70 = sadd.s32 %s69, 1
      %s71 = scalar_select %p68, %s69, %s70
      %p74 = pneg %p68
      %p75 = scmp.eq.s32.totalorder %s17, 1
      %p76 = por %p74, %p75
      %p77 = scmp.ne.s32.totalorder %s69, %s72
      %p78 = scmp.eq.s32.totalorder %s17, 0
      %p79 = por %p77, %p78
      %p80 = scmp.ne.s32.totalorder %s69, %s72
      %p81 = scmp.eq.s32.totalorder %s22, 1
      %p82 = por %p80, %p81
      %p83 = scmp.ne.s32.totalorder %s72, %s73
      %p84 = scmp.eq.s32.totalorder %s22, 0
      %p85 = por %p83, %p84
      %p86 = scmp.ne.s32.totalorder %s72, %s73
      %p87 = scmp.eq.s32.totalorder %s23, 1
      %p88 = por %p86, %p87
      %p90 = scmp.ne.s32.totalorder %s73, %s89
      %p91 = scmp.eq.s32.totalorder %s23, 0
      %p92 = por %p90, %p91
      %s93 = ssub.s32 %s24, %s36
      %s94 = ssub.s32 %s25, %s32
      %s95 = sor.u32 %s93, %s94
      %p96 = scmp.eq.s32.totalorder %s95, 0
      %s98 = sadd.s32 %s97, 1
      %s99 = scalar_select %p96, %s97, %s98
      %p102 = pneg %p96
      %p103 = scmp.eq.s32.totalorder %s17, 1
      %p104 = por %p102, %p103
      %p105 = scmp.ne.s32.totalorder %s97, %s100
      %p106 = scmp.eq.s32.totalorder %s17, 0
      %p107 = por %p105, %p106
      %p108 = scmp.ne.s32.totalorder %s97, %s100
      %p109 = scmp.eq.s32.totalorder %s22, 1
      %p110 = por %p108, %p109
      %p111 = scmp.ne.s32.totalorder %s100, %s101
      %p112 = scmp.eq.s32.totalorder %s22, 0
      %p113 = por %p111, %p112
      %p114 = scmp.ne.s32.totalorder %s100, %s101
      %p115 = scmp.eq.s32.totalorder %s23, 1
      %p116 = por %p114, %p115
      %p118 = scmp.ne.s32.totalorder %s101, %s117
      %p119 = scmp.eq.s32.totalorder %s23, 0
      %p120 = por %p118, %p119
      %p121 = scmp.le.s32.totalorder 1, %s17
      %p122 = scmp.lt.s32.totalorder %s17, 3
      %p123 = pnand %p121, %p122
      %p124 = pneg %p123
      // Predicated region
      $region9: #{tpu_custom_call.1} parent=5 // pred_check
        _
      $region10: #{tpu_custom_call.1} parent=5 // pred_check_branch
        %126 = sbr.rel (%p123) target = $region12
      $region11: #{tpu_custom_call.1} parent=5 // pred_region
        %s127 = ssub.s32 %s17, 1
      $region12: #{tpu_custom_call.1} parent=5 // pred_fallthru
        _
      %p128 = scmp.lt.s32.totalorder %s17, 2
      // Predicated region
      $region13: #{tpu_custom_call.1} parent=5 // pred_check
        %p129 = pneg %p128
      $region14: #{tpu_custom_call.1} parent=5 // pred_check_branch
        %131 = sbr.rel (%p129) target = $region16
      $region15: #{tpu_custom_call.1} parent=5 // pred_region
        // Predicated region
        $region17: #{tpu_custom_call.1} parent=15 // pred_check
          %p132 = pneg %p51
        $region18: #{tpu_custom_call.1} parent=15 // pred_check_branch
          %134 = sbr.rel (%p132) target = $region20
        $region19: #{tpu_custom_call.1} parent=15 // pred_region
          %s135 = sand.u32 %s41, 1
          %s136 = scalar_lea.sflag [#allocation3], %s135
          %s137 = sand.u32 %s41, 1
          %s138 = smul.addr %s137, 2
          %s139 = scalar_lea.vmem [#allocation2], %s138
          %s140 = smul.u32 2, %s25
          %s142 = ssub.s32 32, 32
          %143 = vsyncadd %s136, %s142
          %s144 = smul.addr %s24, 2
          %s145 = sadd.s32 %s140, %s144
          %s146 = smul.addr %s145, 16
          %s147 = scalar_lea.hbm %s0, %s146
          %s149 = sshll.u32 %s139, 4
          %s150 = int_to_ptr.vmem [resolvable:$true] %s149
          %152 = dma.hbm_to_vmem [thread:$0]  %s147, 32, %s150, %s136
        $region20: #{tpu_custom_call.1} parent=15 // pred_fallthru
          _
        // Predicated region
        $region21: #{tpu_custom_call.1} parent=15 // pred_check
          %p153 = pneg %p79
        $region22: #{tpu_custom_call.1} parent=15 // pred_check_branch
          %155 = sbr.rel (%p153) target = $region24
        $region23: #{tpu_custom_call.1} parent=15 // pred_region
          %s156 = sand.u32 %s69, 1
          %s157 = scalar_lea.sflag [#allocation6], %s156
          %s158 = sand.u32 %s69, 1
          %s159 = smul.addr %s158, 8
          %s160 = scalar_lea.vmem [#allocation5], %s159
          %s161 = smul.u32 2, %s25
          %s163 = ssub.s32 128, 128
          %164 = vsyncadd %s157, %s163
          %s165 = smul.addr %s24, 2
          %s166 = sadd.s32 %s161, %s165
          %s167 = smul.addr %s166, 64
          %s168 = scalar_lea.hbm %s1, %s167
          %s170 = sshll.u32 %s160, 4
          %s171 = int_to_ptr.vmem [resolvable:$true] %s170
          %173 = dma.hbm_to_vmem [thread:$0]  %s168, 128, %s171, %s157
        $region24: #{tpu_custom_call.1} parent=15 // pred_fallthru
          _
      $region16: #{tpu_custom_call.1} parent=5 // pred_fallthru
        _
      %p174 = scmp.le.s32.totalorder 1, %s17
      %p175 = scmp.lt.s32.totalorder %s17, 3
      %p176 = pnand %p174, %p175
      %p177 = pneg %p176
      // Predicated region
      $region25: #{tpu_custom_call.1} parent=5 // pred_check
        _
      $region26: #{tpu_custom_call.1} parent=5 // pred_check_branch
        %179 = sbr.rel (%p176) target = $region28
      $region27: #{tpu_custom_call.1} parent=5 // pred_region
        %s180 = ssub.s32 %s17, 1
        %s181 = sand.u32 %s44, 1
        %s182 = scalar_lea.sflag [#allocation3], %s181
        %s183 = sand.u32 %s44, 1
        %s184 = smul.addr %s183, 2
        %s185 = scalar_lea.vmem [#allocation2], %s184
        // Predicated region
        $region29: #{tpu_custom_call.1} parent=27 // pred_check
          %p186 = pneg %p57
        $region30: #{tpu_custom_call.1} parent=27 // pred_check_branch
          %188 = sbr.rel (%p186) target = $region32
        $region31: #{tpu_custom_call.1} parent=27 // pred_region
          %189 = dma.done %s182, 32
        $region32: #{tpu_custom_call.1} parent=27 // pred_fallthru
          _
        %s190 = sand.u32 %s72, 1
        %s191 = scalar_lea.sflag [#allocation6], %s190
        %s192 = sand.u32 %s72, 1
        %s193 = smul.addr %s192, 8
        %s194 = scalar_lea.vmem [#allocation5], %s193
        // Predicated region
        $region33: #{tpu_custom_call.1} parent=27 // pred_check
          %p195 = pneg %p85
        $region34: #{tpu_custom_call.1} parent=27 // pred_check_branch
          %197 = sbr.rel (%p195) target = $region36
        $region35: #{tpu_custom_call.1} parent=27 // pred_region
          %198 = dma.done %s191, 128
        $region36: #{tpu_custom_call.1} parent=27 // pred_fallthru
          _
        %s199 = sand.u32 %s44, 1
        %s200 = scalar_lea.sflag [#allocation3], %s199
        %s201 = sand.u32 %s44, 1
        %s202 = smul.addr %s201, 2
        %s203 = scalar_lea.vmem [#allocation2], %s202
        %p204 = pneg %p57
        %p205 = pneg %p54
        %s206 = sand.u32 %s72, 1
        %s207 = scalar_lea.sflag [#allocation6], %s206
        %s208 = sand.u32 %s72, 1
        %s209 = smul.addr %s208, 8
        %s210 = scalar_lea.vmem [#allocation5], %s209
        %p211 = pneg %p85
        %p212 = pneg %p82
        %p213 = pneg %p113
        %p214 = pneg %p110
        %s215 = sand.u32 %s100, 1
        %s216 = scalar_lea.sflag [#allocation4], %s215
        %s217 = sand.u32 %s100, 1
        %s218 = smul.addr %s217, 8
        %s219 = scalar_lea.vmem [#allocation7], %s218
        %s220 = smul.u32 2, %s27
        %s221 = smul.u32 2, %s27
        %s222 = smul.u32 2, %s27
        %v223 = vld [vmem:[%s185] sm:$0x3]
        %v224 = vld [vmem:[%s194] sm:$0xff]
        %vm225 = vcmp.lt.u32.totalorder %v223, 858993459
        %vm226 = vcmp.lt.u32.totalorder %v223, 429496729
        %v227 = vsel %vm226, 0.0, 1.0
        %v228 = vsel %vm225, 1, 0
        %v229 = vlaneseq
        %v230 = vshrl.u32 %v229, 7
        %v231 = vsub.s32 0, %v230
        %v232 = vrot.slane %v228, %v231
        %v233 = vlaneseq
        %v234 = vshrl.u32 %v233, 7
        %v235 = vsub.s32 1, %v234
        %v236 = vrot.slane %v228, %v235
        %vm237 = vcmp.eq.s32.totalorder %v232, 1
        %vm238 = vcmp.eq.s32.totalorder %v236, 1
        %v240 = vlaneseq
        %v241 = vshrl.u32 %v240, 7
        %v242 = vsub.s32 0, %v241
        %v243 = vrot.slane %v227, %v242
        %v244 = vlaneseq
        %v245 = vshrl.u32 %v244, 7
        %v246 = vsub.s32 1, %v245
        %v247 = vrot.slane %v227, %v246
        %v251 = vcombine.high %v224, %v224
        %v253 = vsel %vm237, %v243, %v224
        %v254 = vsel %vm238, %v247, %v251
        %v257 = vcombine.low %v253, %v254
        %259 = vst [vmem:[%s219] sm:$0xff] %v257
        %s260 = sand.u32 %s100, 1
        %s261 = scalar_lea.sflag [#allocation4], %s260
        %s262 = sand.u32 %s100, 1
        %s263 = smul.addr %s262, 8
        %s264 = scalar_lea.vmem [#allocation7], %s263
        // Predicated region
        $region37: #{tpu_custom_call.1} parent=27 // pred_check
          %p265 = pneg %p110
        $region38: #{tpu_custom_call.1} parent=27 // pred_check_branch
          %267 = sbr.rel (%p265) target = $region40
        $region39: #{tpu_custom_call.1} parent=27 // pred_region
          %s268 = smul.u32 2, %s27
          %s270 = ssub.s32 128, 128
          %271 = vsyncadd %s261, %s270
          %s272 = smul.addr %s26, 2
          %s273 = sadd.s32 %s268, %s272
          %s274 = smul.addr %s273, 64
          %s275 = scalar_lea.hbm %s2, %s274
          %s277 = sshll.u32 %s264, 4
          %s278 = int_to_ptr.vmem [resolvable:$true] %s277
          %280 = dma.vmem_to_hbm [thread:$0]  %s278, 128, %s275, %s261
        $region40: #{tpu_custom_call.1} parent=27 // pred_fallthru
          _
      $region28: #{tpu_custom_call.1} parent=5 // pred_fallthru
        _
      %p281 = scmp.le.s32.totalorder 2, %s17
      // Predicated region
      $region41: #{tpu_custom_call.1} parent=5 // pred_check
        %p282 = pneg %p281
      $region42: #{tpu_custom_call.1} parent=5 // pred_check_branch
        %284 = sbr.rel (%p282) target = $region44
      $region43: #{tpu_custom_call.1} parent=5 // pred_region
        %s285 = ssub.s32 %s17, 2
        // Predicated region
        $region45: #{tpu_custom_call.1} parent=43 // pred_check
          %p286 = pneg %p116
        $region46: #{tpu_custom_call.1} parent=43 // pred_check_branch
          %288 = sbr.rel (%p286) target = $region48
        $region47: #{tpu_custom_call.1} parent=43 // pred_region
          %s289 = sand.u32 %s101, 1
          %s290 = scalar_lea.sflag [#allocation4], %s289
          %s291 = sand.u32 %s101, 1
          %s292 = smul.addr %s291, 8
          %s293 = scalar_lea.vmem [#allocation7], %s292
          %294 = dma.done %s290, 128
        $region48: #{tpu_custom_call.1} parent=43 // pred_fallthru
          _
      $region44: #{tpu_custom_call.1} parent=5 // pred_fallthru
        _
    $region6: #{tpu_custom_call.1} parent=1 // loop_footer
      %s21 = sadd.s32 1, %s17
    $region7: #{tpu_custom_call.1} parent=1 // loop_footer_branch
      %16 = sbr.rel target = $region3
    $region8: #{tpu_custom_call.1} parent=1 // loop_exit
      _
    %295 = vsyncpa [#allocation3], 1
    %s296 = scalar_lea.sflag [#allocation3], 1
    %297 = vsyncpa %s296, 1
    %298 = vsyncpa [#allocation6], 1
    %s299 = scalar_lea.sflag [#allocation6], 1
    %300 = vsyncpa %s299, 1
    %301 = vsyncpa [#allocation4], 1
    %s302 = scalar_lea.sflag [#allocation4], 1
    %303 = vsyncpa %s302, 1

</llo_original>
